<compile_context>
chip_gen: v7x
topology: tpu7x:2x2x1
jax: 0.10.0
libtpu: 0.0.40
codegen_flags: <defaults>
</compile_context>

<pallas_src>
import functools
import math

import jax
import jax.numpy as jnp
from jax.experimental import pallas as pl
from jax.experimental.pallas import tpu as pltpu


def _msel_feat_kernel(rgb_ref, ir_ref, out_ref, *, num_pos, groups_per_tile):
    """One grid step handles `groups_per_tile` identity groups.

    rgb_ref / ir_ref : (GT * P, D) blocks in native dtype; rows of the same
                       group are contiguous (group g occupies rows [g*P,(g+1)*P)).
    out_ref          : (1, 1, 1) f32 -- partial (un-normalized) loss sum.
    """
    P = num_pos
    GT = groups_per_tile

    # position-p row of every group in the block: rows p, p+P, ..., p+(GT-1)*P
    def pos_rows(ref, p):
        return ref[pl.ds(p, GT, P), :].astype(jnp.float32)        # (GT, D)

    rgb = [pos_rows(rgb_ref, p) for p in range(P)]
    ir = [pos_rows(ir_ref, p) for p in range(P)]

    # per-group sums (each group's data touched exactly once)
    sum_rgb = rgb[0]
    sum_ir = ir[0]
    for p in range(1, P):
        sum_rgb = sum_rgb + rgb[p]
        sum_ir = sum_ir + ir[p]

    cross_center_rgb = sum_rgb * (1.0 / P)                        # (GT, D)
    cross_center_ir = sum_ir * (1.0 / P)                          # (GT, D)

    inv_pm1_sq = 1.0 / float((P - 1) * (P - 1))

    def sq_norm(t):                                               # (GT, D) -> (GT, 1)
        return jnp.sum(t * t, axis=-1, keepdims=True)

    def clamped_sqrt(sq):                                         # clamp(min=1e-12).sqrt()
        return jnp.sqrt(jnp.maximum(sq, 1e-12))

    acc = jnp.zeros((1, 1), jnp.float32)
    for p in range(P):
        xr = rgb[p]
        xi = ir[p]
        # Intra centers use the RGB features for BOTH modalities (faithful to
        # the original code):  ic = (sum_rgb - xr) / (P - 1)
        #   ||xr - ic|| = ||P*xr - sum_rgb|| / (P - 1)
        #   ||xi - ic|| = ||(P-1)*xi + xr - sum_rgb|| / (P - 1)
        d_intra_rgb = clamped_sqrt(sq_norm(P * xr - sum_rgb) * inv_pm1_sq)
        d_intra_ir = clamped_sqrt(sq_norm((P - 1.0) * xi + xr - sum_rgb) * inv_pm1_sq)
        d_cross_rgb = clamped_sqrt(sq_norm(xr - cross_center_ir))
        d_cross_ir = clamped_sqrt(sq_norm(xi - cross_center_rgb))
        per = (d_cross_rgb - d_intra_rgb) ** 2 + (d_cross_ir - d_intra_ir) ** 2
        acc = acc + jnp.sum(per, axis=0, keepdims=True)           # (1, 1)

    out_ref[...] = acc[None]                                      # (1, 1, 1)


def _sublane_quantum(num_pos, itemsize):
    # smallest GT step so GT*num_pos rows are sublane-aligned (8 rows for 4-byte
    # dtypes, 16 for 2-byte, 32 for 1-byte)
    sub = {4: 8, 2: 16, 1: 32}.get(itemsize, 8)
    return sub // math.gcd(num_pos, sub)


def _choose_groups_per_tile(G, P, D, itemsize):
    quantum = _sublane_quantum(P, itemsize)
    # ~2 MiB input blocks approach the HBM roofline and fit comfortably inside
    # scoped VMEM (2 inputs x 2 pipeline buffers + in-kernel f32 temporaries)
    # on v5e/v6e/v7x.
    target_block_bytes = 2 << 20
    bytes_per_group = P * D * itemsize
    gt_bytes = max(1, target_block_bytes // bytes_per_group)
    # keep >= 8 grid steps when possible (v7x has 2 TensorCores; also keeps the
    # pipeline busy) -- for small problems this wins over bigger blocks.
    desired_tiles = max(1, min(8, G))
    gt_tiles = max(1, -(-G // desired_tiles))
    gt = min(gt_bytes, gt_tiles)
    gt = -(-gt // quantum) * quantum
    return max(quantum, gt)


def msel_feat_loss(input1, input2, num_pos, *, groups_per_tile=None):
    """input1 / input2: (N, D) feature matrices; num_pos: samples per identity."""
    N, D = input1.shape
    assert input2.shape == (N, D)
    P = int(num_pos)
    assert P >= 2, "num_pos must be >= 2 (leave-one-out mean undefined otherwise)"
    assert N % P == 0
    G = N // P

    itemsize = jnp.dtype(input1.dtype).itemsize
    quantum = _sublane_quantum(P, itemsize)

    if groups_per_tile is None:
        GT = _choose_groups_per_tile(G, P, D, itemsize)
    else:
        GT = max(quantum, -(-int(groups_per_tile) // quantum) * quantum)

    # Pad the group count with all-zero groups so it divides evenly.  Zero
    # groups contribute exactly 0 to this loss (all four clamped distances are
    # 1e-6 and cancel), so the result is unchanged.  This only costs an HBM
    # copy when G is actually ragged w.r.t. the chosen tile.
    G_pad = -(-G // GT) * GT
    if G_pad != G:
        extra_rows = (G_pad - G) * P
        input1 = jnp.pad(input1, ((0, extra_rows), (0, 0)))
        input2 = jnp.pad(input2, ((0, extra_rows), (0, 0)))
    n_tiles = G_pad // GT
    rows = GT * P  # multiple of the sublane quantum (or equals the padded N)

    out = pl.pallas_call(
        functools.partial(_msel_feat_kernel, num_pos=P, groups_per_tile=GT),
        out_shape=jax.ShapeDtypeStruct((n_tiles, 1, 1), jnp.float32),
        grid_spec=pltpu.PrefetchScalarGridSpec(
            num_scalar_prefetch=0,
            grid=(n_tiles,),
            in_specs=[
                pl.BlockSpec((rows, D), lambda g: (g, 0)),   # rgb rows (native dtype)
                pl.BlockSpec((rows, D), lambda g: (g, 0)),   # ir  rows (native dtype)
            ],
            out_specs=pl.BlockSpec((1, 1, 1), lambda g: (g, 0, 0)),
        ),
        compiler_params=pltpu.CompilerParams(
            dimension_semantics=("parallel",),
            vmem_limit_bytes=32 * 1024 * 1024,
        ),
    )(input1, input2)

    # tiny final reduction over per-tile partials: sum(loss_list) / N / 2
    return jnp.sum(out) / N / 2.0


# ---------------------------------------------------------------------------
# pure-JAX literal port of the PyTorch module, used as a correctness reference
# ---------------------------------------------------------------------------
def _pdist_ref(emb1, emb2):
    e1 = jnp.sum(emb1 ** 2, axis=1, keepdims=True)
    e2 = jnp.sum(emb2 ** 2, axis=1, keepdims=True).T
    d = e1 + e2 - 2.0 * emb1 @ emb2.T
    return jnp.sqrt(jnp.maximum(d, 1e-12))


def _msel_feat_ref(input1, input2, num_pos):
    N = input1.shape[0]
    id_num = N // num_pos
    feats_rgb = jnp.split(input1, id_num, axis=0)
    feats_ir = jnp.split(input2, id_num, axis=0)
    loss_list = []
    for i in range(id_num):
        cc_rgb = jnp.mean(feats_rgb[i], axis=0)
        cc_ir = jnp.mean(feats_ir[i], axis=0)
        for j in range(num_pos):
            f_rgb = feats_rgb[i][j]
            f_ir = feats_ir[i][j]
            intra_rgb = jnp.concatenate(
                [feats_rgb[i][:j], feats_rgb[i][j + 1:]], axis=0)
            intra_ir = jnp.concatenate(                 # original code uses rgb here too
                [feats_rgb[i][:j], feats_rgb[i][j + 1:]], axis=0)
            ic_rgb = jnp.mean(intra_rgb, axis=0)
            ic_ir = jnp.mean(intra_ir, axis=0)
            d_i_rgb = _pdist_ref(f_rgb[None], ic_rgb[None])
            d_i_ir = _pdist_ref(f_ir[None], ic_ir[None])
            d_c_rgb = _pdist_ref(f_rgb[None], cc_ir[None])
            d_c_ir = _pdist_ref(f_ir[None], cc_rgb[None])
            loss_list.append((d_c_rgb - d_i_rgb) ** 2 + (d_c_ir - d_i_ir) ** 2)
    return (sum(loss_list) / N / 2.0)[0, 0]


if __name__ == "__main__":
    key = jax.random.PRNGKey(0)

    # case 1: num_pos=4, id_num=4 -> batch=16, feat=32 (D NOT a multiple of 128)
    num_pos = 4
    id_num = 4
    N = num_pos * id_num
    D = 32
    k1, k2, k3, k4 = jax.random.split(key, 4)
    input1 = jax.random.normal(k1, (N, D), dtype=jnp.float32)
    input2 = jax.random.normal(k2, (N, D), dtype=jnp.float32)

    loss = jax.block_until_ready(msel_feat_loss(input1, input2, num_pos))
    ref = _msel_feat_ref(input1, input2, num_pos)
    assert jnp.allclose(loss, ref, rtol=1e-4, atol=1e-4), (loss, ref)

    # case 2: odd group count (exercises the zero-group padding path)
    id_num2 = 5
    N2 = num_pos * id_num2
    D2 = 48
    input1b = jax.random.normal(k3, (N2, D2), dtype=jnp.float32)
    input2b = jax.random.normal(k4, (N2, D2), dtype=jnp.float32)

    loss2 = jax.block_until_ready(msel_feat_loss(input1b, input2b, num_pos))
    ref2 = _msel_feat_ref(input1b, input2b, num_pos)
    assert jnp.allclose(loss2, ref2, rtol=1e-4, atol=1e-4), (loss2, ref2)

    print("KERNEL_OK")
</pallas_src>

<mosaic_0001>
module attributes {stable_mosaic.version = 11 : i64} {
  func.func @_msel_feat_kernel(%arg0: i32, %arg1: memref<8x32xf32, #tpu.memory_space<vmem>>, %arg2: memref<8x32xf32, #tpu.memory_space<vmem>>, %arg3: memref<1x1x1xf32, #tpu.memory_space<vmem>>) attributes {dimension_semantics = [#tpu.dimension_semantics<parallel>], iteration_bounds = array<i64: 2>, scalar_prefetch = 0 : i64, scratch_operands = 0 : i64, tpu.core_type = #tpu.core_type<tc>, window_params = [{transform_indices = @transform_0, window_bounds = array<i64: 8, 32>}, {transform_indices = @transform_1, window_bounds = array<i64: 8, 32>}, {transform_indices = @transform_2, window_bounds = array<i64: 1, 1, 1>}]} {
    %c0 = arith.constant 0 : index
    %c0_0 = arith.constant 0 : index
    %0 = tpu.strided_load %arg1[%c0, %c0_0] {strides = array<i32: 4, 1>} : memref<8x32xf32, #tpu.memory_space<vmem>>, vector<2x32xf32>
    %c1 = arith.constant 1 : index
    %c0_1 = arith.constant 0 : index
    %1 = tpu.strided_load %arg1[%c1, %c0_1] {strides = array<i32: 4, 1>} : memref<8x32xf32, #tpu.memory_space<vmem>>, vector<2x32xf32>
    %c2 = arith.constant 2 : index
    %c0_2 = arith.constant 0 : index
    %2 = tpu.strided_load %arg1[%c2, %c0_2] {strides = array<i32: 4, 1>} : memref<8x32xf32, #tpu.memory_space<vmem>>, vector<2x32xf32>
    %c3 = arith.constant 3 : index
    %c0_3 = arith.constant 0 : index
    %3 = tpu.strided_load %arg1[%c3, %c0_3] {strides = array<i32: 4, 1>} : memref<8x32xf32, #tpu.memory_space<vmem>>, vector<2x32xf32>
    %c0_4 = arith.constant 0 : index
    %c0_5 = arith.constant 0 : index
    %4 = tpu.strided_load %arg2[%c0_4, %c0_5] {strides = array<i32: 4, 1>} : memref<8x32xf32, #tpu.memory_space<vmem>>, vector<2x32xf32>
    %c1_6 = arith.constant 1 : index
    %c0_7 = arith.constant 0 : index
    %5 = tpu.strided_load %arg2[%c1_6, %c0_7] {strides = array<i32: 4, 1>} : memref<8x32xf32, #tpu.memory_space<vmem>>, vector<2x32xf32>
    %c2_8 = arith.constant 2 : index
    %c0_9 = arith.constant 0 : index
    %6 = tpu.strided_load %arg2[%c2_8, %c0_9] {strides = array<i32: 4, 1>} : memref<8x32xf32, #tpu.memory_space<vmem>>, vector<2x32xf32>
    %c3_10 = arith.constant 3 : index
    %c0_11 = arith.constant 0 : index
    %7 = tpu.strided_load %arg2[%c3_10, %c0_11] {strides = array<i32: 4, 1>} : memref<8x32xf32, #tpu.memory_space<vmem>>, vector<2x32xf32>
    %8 = arith.addf %0, %1 : vector<2x32xf32>
    %9 = arith.addf %4, %5 : vector<2x32xf32>
    %10 = arith.addf %8, %2 : vector<2x32xf32>
    %11 = arith.addf %9, %6 : vector<2x32xf32>
    %12 = arith.addf %10, %3 : vector<2x32xf32>
    %13 = arith.addf %11, %7 : vector<2x32xf32>
    %cst = arith.constant 2.500000e-01 : f32
    %14 = vector.broadcast %cst : f32 to vector<2x32xf32>
    %15 = arith.mulf %12, %14 : vector<2x32xf32>
    %cst_12 = arith.constant 2.500000e-01 : f32
    %16 = vector.broadcast %cst_12 : f32 to vector<2x32xf32>
    %17 = arith.mulf %13, %16 : vector<2x32xf32>
    %cst_13 = arith.constant 0.000000e+00 : f32
    %18 = vector.broadcast %cst_13 : f32 to vector<1x1xf32>
    %cst_14 = arith.constant 4.000000e+00 : f32
    %19 = vector.broadcast %cst_14 : f32 to vector<2x32xf32>
    %20 = arith.mulf %19, %0 : vector<2x32xf32>
    %21 = arith.subf %20, %12 : vector<2x32xf32>
    %22 = arith.mulf %21, %21 : vector<2x32xf32>
    %cst_15 = arith.constant dense<0.000000e+00> : vector<2xf32>
    %23 = vector.multi_reduction <add>, %22, %cst_15 [1] : vector<2x32xf32> to vector<2xf32>
    %24 = vector.shape_cast %23 : vector<2xf32> to vector<2x1xf32>
    %cst_16 = arith.constant 0.111111112 : f32
    %25 = vector.broadcast %cst_16 : f32 to vector<2x1xf32>
    %26 = arith.mulf %24, %25 : vector<2x1xf32>
    %cst_17 = arith.constant 9.99999996E-13 : f32
    %27 = vector.broadcast %cst_17 : f32 to vector<2x1xf32>
    %28 = arith.maximumf %26, %27 : vector<2x1xf32>
    %29 = math.sqrt %28 : vector<2x1xf32>
    %cst_18 = arith.constant 3.000000e+00 : f32
    %30 = vector.broadcast %cst_18 : f32 to vector<2x32xf32>
    %31 = arith.mulf %30, %4 : vector<2x32xf32>
    %32 = arith.addf %31, %0 : vector<2x32xf32>
    %33 = arith.subf %32, %12 : vector<2x32xf32>
    %34 = arith.mulf %33, %33 : vector<2x32xf32>
    %cst_19 = arith.constant dense<0.000000e+00> : vector<2xf32>
    %35 = vector.multi_reduction <add>, %34, %cst_19 [1] : vector<2x32xf32> to vector<2xf32>
    %36 = vector.shape_cast %35 : vector<2xf32> to vector<2x1xf32>
    %cst_20 = arith.constant 0.111111112 : f32
    %37 = vector.broadcast %cst_20 : f32 to vector<2x1xf32>
    %38 = arith.mulf %36, %37 : vector<2x1xf32>
    %cst_21 = arith.constant 9.99999996E-13 : f32
    %39 = vector.broadcast %cst_21 : f32 to vector<2x1xf32>
    %40 = arith.maximumf %38, %39 : vector<2x1xf32>
    %41 = math.sqrt %40 : vector<2x1xf32>
    %42 = arith.subf %0, %17 : vector<2x32xf32>
    %43 = arith.mulf %42, %42 : vector<2x32xf32>
    %cst_22 = arith.constant dense<0.000000e+00> : vector<2xf32>
    %44 = vector.multi_reduction <add>, %43, %cst_22 [1] : vector<2x32xf32> to vector<2xf32>
    %45 = vector.shape_cast %44 : vector<2xf32> to vector<2x1xf32>
    %cst_23 = arith.constant 9.99999996E-13 : f32
    %46 = vector.broadcast %cst_23 : f32 to vector<2x1xf32>
    %47 = arith.maximumf %45, %46 : vector<2x1xf32>
    %48 = math.sqrt %47 : vector<2x1xf32>
    %49 = arith.subf %4, %15 : vector<2x32xf32>
    %50 = arith.mulf %49, %49 : vector<2x32xf32>
    %cst_24 = arith.constant dense<0.000000e+00> : vector<2xf32>
    %51 = vector.multi_reduction <add>, %50, %cst_24 [1] : vector<2x32xf32> to vector<2xf32>
    %52 = vector.shape_cast %51 : vector<2xf32> to vector<2x1xf32>
    %cst_25 = arith.constant 9.99999996E-13 : f32
    %53 = vector.broadcast %cst_25 : f32 to vector<2x1xf32>
    %54 = arith.maximumf %52, %53 : vector<2x1xf32>
    %55 = math.sqrt %54 : vector<2x1xf32>
    %56 = arith.subf %48, %29 : vector<2x1xf32>
    %57 = arith.mulf %56, %56 : vector<2x1xf32>
    %58 = arith.subf %55, %41 : vector<2x1xf32>
    %59 = arith.mulf %58, %58 : vector<2x1xf32>
    %60 = arith.addf %57, %59 : vector<2x1xf32>
    %cst_26 = arith.constant dense<0.000000e+00> : vector<1xf32>
    %61 = vector.multi_reduction <add>, %60, %cst_26 [0] : vector<2x1xf32> to vector<1xf32>
    %62 = vector.shape_cast %61 : vector<1xf32> to vector<1x1xf32>
    %63 = arith.addf %18, %62 : vector<1x1xf32>
    %cst_27 = arith.constant 4.000000e+00 : f32
    %64 = vector.broadcast %cst_27 : f32 to vector<2x32xf32>
    %65 = arith.mulf %64, %1 : vector<2x32xf32>
    %66 = arith.subf %65, %12 : vector<2x32xf32>
    %67 = arith.mulf %66, %66 : vector<2x32xf32>
    %cst_28 = arith.constant dense<0.000000e+00> : vector<2xf32>
    %68 = vector.multi_reduction <add>, %67, %cst_28 [1] : vector<2x32xf32> to vector<2xf32>
    %69 = vector.shape_cast %68 : vector<2xf32> to vector<2x1xf32>
    %cst_29 = arith.constant 0.111111112 : f32
    %70 = vector.broadcast %cst_29 : f32 to vector<2x1xf32>
    %71 = arith.mulf %69, %70 : vector<2x1xf32>
    %cst_30 = arith.constant 9.99999996E-13 : f32
    %72 = vector.broadcast %cst_30 : f32 to vector<2x1xf32>
    %73 = arith.maximumf %71, %72 : vector<2x1xf32>
    %74 = math.sqrt %73 : vector<2x1xf32>
    %cst_31 = arith.constant 3.000000e+00 : f32
    %75 = vector.broadcast %cst_31 : f32 to vector<2x32xf32>
    %76 = arith.mulf %75, %5 : vector<2x32xf32>
    %77 = arith.addf %76, %1 : vector<2x32xf32>
    %78 = arith.subf %77, %12 : vector<2x32xf32>
    %79 = arith.mulf %78, %78 : vector<2x32xf32>
    %cst_32 = arith.constant dense<0.000000e+00> : vector<2xf32>
    %80 = vector.multi_reduction <add>, %79, %cst_32 [1] : vector<2x32xf32> to vector<2xf32>
    %81 = vector.shape_cast %80 : vector<2xf32> to vector<2x1xf32>
    %cst_33 = arith.constant 0.111111112 : f32
    %82 = vector.broadcast %cst_33 : f32 to vector<2x1xf32>
    %83 = arith.mulf %81, %82 : vector<2x1xf32>
    %cst_34 = arith.constant 9.99999996E-13 : f32
    %84 = vector.broadcast %cst_34 : f32 to vector<2x1xf32>
    %85 = arith.maximumf %83, %84 : vector<2x1xf32>
    %86 = math.sqrt %85 : vector<2x1xf32>
    %87 = arith.subf %1, %17 : vector<2x32xf32>
    %88 = arith.mulf %87, %87 : vector<2x32xf32>
    %cst_35 = arith.constant dense<0.000000e+00> : vector<2xf32>
    %89 = vector.multi_reduction <add>, %88, %cst_35 [1] : vector<2x32xf32> to vector<2xf32>
    %90 = vector.shape_cast %89 : vector<2xf32> to vector<2x1xf32>
    %cst_36 = arith.constant 9.99999996E-13 : f32
    %91 = vector.broadcast %cst_36 : f32 to vector<2x1xf32>
    %92 = arith.maximumf %90, %91 : vector<2x1xf32>
    %93 = math.sqrt %92 : vector<2x1xf32>
    %94 = arith.subf %5, %15 : vector<2x32xf32>
    %95 = arith.mulf %94, %94 : vector<2x32xf32>
    %cst_37 = arith.constant dense<0.000000e+00> : vector<2xf32>
    %96 = vector.multi_reduction <add>, %95, %cst_37 [1] : vector<2x32xf32> to vector<2xf32>
    %97 = vector.shape_cast %96 : vector<2xf32> to vector<2x1xf32>
    %cst_38 = arith.constant 9.99999996E-13 : f32
    %98 = vector.broadcast %cst_38 : f32 to vector<2x1xf32>
    %99 = arith.maximumf %97, %98 : vector<2x1xf32>
    %100 = math.sqrt %99 : vector<2x1xf32>
    %101 = arith.subf %93, %74 : vector<2x1xf32>
    %102 = arith.mulf %101, %101 : vector<2x1xf32>
    %103 = arith.subf %100, %86 : vector<2x1xf32>
    %104 = arith.mulf %103, %103 : vector<2x1xf32>
    %105 = arith.addf %102, %104 : vector<2x1xf32>
    %cst_39 = arith.constant dense<0.000000e+00> : vector<1xf32>
    %106 = vector.multi_reduction <add>, %105, %cst_39 [0] : vector<2x1xf32> to vector<1xf32>
    %107 = vector.shape_cast %106 : vector<1xf32> to vector<1x1xf32>
    %108 = arith.addf %63, %107 : vector<1x1xf32>
    %cst_40 = arith.constant 4.000000e+00 : f32
    %109 = vector.broadcast %cst_40 : f32 to vector<2x32xf32>
    %110 = arith.mulf %109, %2 : vector<2x32xf32>
    %111 = arith.subf %110, %12 : vector<2x32xf32>
    %112 = arith.mulf %111, %111 : vector<2x32xf32>
    %cst_41 = arith.constant dense<0.000000e+00> : vector<2xf32>
    %113 = vector.multi_reduction <add>, %112, %cst_41 [1] : vector<2x32xf32> to vector<2xf32>
    %114 = vector.shape_cast %113 : vector<2xf32> to vector<2x1xf32>
    %cst_42 = arith.constant 0.111111112 : f32
    %115 = vector.broadcast %cst_42 : f32 to vector<2x1xf32>
    %116 = arith.mulf %114, %115 : vector<2x1xf32>
    %cst_43 = arith.constant 9.99999996E-13 : f32
    %117 = vector.broadcast %cst_43 : f32 to vector<2x1xf32>
    %118 = arith.maximumf %116, %117 : vector<2x1xf32>
    %119 = math.sqrt %118 : vector<2x1xf32>
    %cst_44 = arith.constant 3.000000e+00 : f32
    %120 = vector.broadcast %cst_44 : f32 to vector<2x32xf32>
    %121 = arith.mulf %120, %6 : vector<2x32xf32>
    %122 = arith.addf %121, %2 : vector<2x32xf32>
    %123 = arith.subf %122, %12 : vector<2x32xf32>
    %124 = arith.mulf %123, %123 : vector<2x32xf32>
    %cst_45 = arith.constant dense<0.000000e+00> : vector<2xf32>
    %125 = vector.multi_reduction <add>, %124, %cst_45 [1] : vector<2x32xf32> to vector<2xf32>
    %126 = vector.shape_cast %125 : vector<2xf32> to vector<2x1xf32>
    %cst_46 = arith.constant 0.111111112 : f32
    %127 = vector.broadcast %cst_46 : f32 to vector<2x1xf32>
    %128 = arith.mulf %126, %127 : vector<2x1xf32>
    %cst_47 = arith.constant 9.99999996E-13 : f32
    %129 = vector.broadcast %cst_47 : f32 to vector<2x1xf32>
    %130 = arith.maximumf %128, %129 : vector<2x1xf32>
    %131 = math.sqrt %130 : vector<2x1xf32>
    %132 = arith.subf %2, %17 : vector<2x32xf32>
    %133 = arith.mulf %132, %132 : vector<2x32xf32>
    %cst_48 = arith.constant dense<0.000000e+00> : vector<2xf32>
    %134 = vector.multi_reduction <add>, %133, %cst_48 [1] : vector<2x32xf32> to vector<2xf32>
    %135 = vector.shape_cast %134 : vector<2xf32> to vector<2x1xf32>
    %cst_49 = arith.constant 9.99999996E-13 : f32
    %136 = vector.broadcast %cst_49 : f32 to vector<2x1xf32>
    %137 = arith.maximumf %135, %136 : vector<2x1xf32>
    %138 = math.sqrt %137 : vector<2x1xf32>
    %139 = arith.subf %6, %15 : vector<2x32xf32>
    %140 = arith.mulf %139, %139 : vector<2x32xf32>
    %cst_50 = arith.constant dense<0.000000e+00> : vector<2xf32>
    %141 = vector.multi_reduction <add>, %140, %cst_50 [1] : vector<2x32xf32> to vector<2xf32>
    %142 = vector.shape_cast %141 : vector<2xf32> to vector<2x1xf32>
    %cst_51 = arith.constant 9.99999996E-13 : f32
    %143 = vector.broadcast %cst_51 : f32 to vector<2x1xf32>
    %144 = arith.maximumf %142, %143 : vector<2x1xf32>
    %145 = math.sqrt %144 : vector<2x1xf32>
    %146 = arith.subf %138, %119 : vector<2x1xf32>
    %147 = arith.mulf %146, %146 : vector<2x1xf32>
    %148 = arith.subf %145, %131 : vector<2x1xf32>
    %149 = arith.mulf %148, %148 : vector<2x1xf32>
    %150 = arith.addf %147, %149 : vector<2x1xf32>
    %cst_52 = arith.constant dense<0.000000e+00> : vector<1xf32>
    %151 = vector.multi_reduction <add>, %150, %cst_52 [0] : vector<2x1xf32> to vector<1xf32>
    %152 = vector.shape_cast %151 : vector<1xf32> to vector<1x1xf32>
    %153 = arith.addf %108, %152 : vector<1x1xf32>
    %cst_53 = arith.constant 4.000000e+00 : f32
    %154 = vector.broadcast %cst_53 : f32 to vector<2x32xf32>
    %155 = arith.mulf %154, %3 : vector<2x32xf32>
    %156 = arith.subf %155, %12 : vector<2x32xf32>
    %157 = arith.mulf %156, %156 : vector<2x32xf32>
    %cst_54 = arith.constant dense<0.000000e+00> : vector<2xf32>
    %158 = vector.multi_reduction <add>, %157, %cst_54 [1] : vector<2x32xf32> to vector<2xf32>
    %159 = vector.shape_cast %158 : vector<2xf32> to vector<2x1xf32>
    %cst_55 = arith.constant 0.111111112 : f32
    %160 = vector.broadcast %cst_55 : f32 to vector<2x1xf32>
    %161 = arith.mulf %159, %160 : vector<2x1xf32>
    %cst_56 = arith.constant 9.99999996E-13 : f32
    %162 = vector.broadcast %cst_56 : f32 to vector<2x1xf32>
    %163 = arith.maximumf %161, %162 : vector<2x1xf32>
    %164 = math.sqrt %163 : vector<2x1xf32>
    %cst_57 = arith.constant 3.000000e+00 : f32
    %165 = vector.broadcast %cst_57 : f32 to vector<2x32xf32>
    %166 = arith.mulf %165, %7 : vector<2x32xf32>
    %167 = arith.addf %166, %3 : vector<2x32xf32>
    %168 = arith.subf %167, %12 : vector<2x32xf32>
    %169 = arith.mulf %168, %168 : vector<2x32xf32>
    %cst_58 = arith.constant dense<0.000000e+00> : vector<2xf32>
    %170 = vector.multi_reduction <add>, %169, %cst_58 [1] : vector<2x32xf32> to vector<2xf32>
    %171 = vector.shape_cast %170 : vector<2xf32> to vector<2x1xf32>
    %cst_59 = arith.constant 0.111111112 : f32
    %172 = vector.broadcast %cst_59 : f32 to vector<2x1xf32>
    %173 = arith.mulf %171, %172 : vector<2x1xf32>
    %cst_60 = arith.constant 9.99999996E-13 : f32
    %174 = vector.broadcast %cst_60 : f32 to vector<2x1xf32>
    %175 = arith.maximumf %173, %174 : vector<2x1xf32>
    %176 = math.sqrt %175 : vector<2x1xf32>
    %177 = arith.subf %3, %17 : vector<2x32xf32>
    %178 = arith.mulf %177, %177 : vector<2x32xf32>
    %cst_61 = arith.constant dense<0.000000e+00> : vector<2xf32>
    %179 = vector.multi_reduction <add>, %178, %cst_61 [1] : vector<2x32xf32> to vector<2xf32>
    %180 = vector.shape_cast %179 : vector<2xf32> to vector<2x1xf32>
    %cst_62 = arith.constant 9.99999996E-13 : f32
    %181 = vector.broadcast %cst_62 : f32 to vector<2x1xf32>
    %182 = arith.maximumf %180, %181 : vector<2x1xf32>
    %183 = math.sqrt %182 : vector<2x1xf32>
    %184 = arith.subf %7, %15 : vector<2x32xf32>
    %185 = arith.mulf %184, %184 : vector<2x32xf32>
    %cst_63 = arith.constant dense<0.000000e+00> : vector<2xf32>
    %186 = vector.multi_reduction <add>, %185, %cst_63 [1] : vector<2x32xf32> to vector<2xf32>
    %187 = vector.shape_cast %186 : vector<2xf32> to vector<2x1xf32>
    %cst_64 = arith.constant 9.99999996E-13 : f32
    %188 = vector.broadcast %cst_64 : f32 to vector<2x1xf32>
    %189 = arith.maximumf %187, %188 : vector<2x1xf32>
    %190 = math.sqrt %189 : vector<2x1xf32>
    %191 = arith.subf %183, %164 : vector<2x1xf32>
    %192 = arith.mulf %191, %191 : vector<2x1xf32>
    %193 = arith.subf %190, %176 : vector<2x1xf32>
    %194 = arith.mulf %193, %193 : vector<2x1xf32>
    %195 = arith.addf %192, %194 : vector<2x1xf32>
    %cst_65 = arith.constant dense<0.000000e+00> : vector<1xf32>
    %196 = vector.multi_reduction <add>, %195, %cst_65 [0] : vector<2x1xf32> to vector<1xf32>
    %197 = vector.shape_cast %196 : vector<1xf32> to vector<1x1xf32>
    %198 = arith.addf %153, %197 : vector<1x1xf32>
    %199 = vector.shape_cast %198 : vector<1x1xf32> to vector<1x1x1xf32>
    %c0_66 = arith.constant 0 : index
    %c0_67 = arith.constant 0 : index
    %c0_68 = arith.constant 0 : index
    %200 = vector.load %arg3[%c0_66, %c0_67, %c0_68] : memref<1x1x1xf32, #tpu.memory_space<vmem>>, vector<1x1x1xf32>
    tpu.vector_store %arg3[%c0_66, %c0_67, %c0_68], %199 {strides = array<i32>} : memref<1x1x1xf32, #tpu.memory_space<vmem>>, vector<1x1x1xf32>,
    return
  }
  func.func @transform_0(%arg0: i32) -> (i32, i32) {
    %c0_i32 = arith.constant 0 : i32
    %c0_i32_0 = arith.constant 0 : i32
    return %arg0, %c0_i32 : i32, i32
  }
  func.func @transform_1(%arg0: i32) -> (i32, i32) {
    %c0_i32 = arith.constant 0 : i32
    %c0_i32_0 = arith.constant 0 : i32
    return %arg0, %c0_i32 : i32, i32
  }
  func.func @transform_2(%arg0: i32) -> (i32, i32, i32) {
    %c0_i32 = arith.constant 0 : i32
    %c0_i32_0 = arith.constant 0 : i32
    %c0_i32_1 = arith.constant 0 : i32
    return %arg0, %c0_i32, %c0_i32_0 : i32, i32, i32
  }
}

</mosaic_0001>

<llo_original>
// kernel: tpu_custom_call.1
$region0: #{tpu_custom_call.1}
  #allocation0 [shape = 'u32[]', space=smem, size = 0x4, offset = 0x4, fixed_abs, tag = 'smem constant byte address 0x4 - core index']
  #allocation1 [shape = 'u32[144,128]{1,0:T(1,128)}', space=vmem, size = 0x12000, scoped, tag = 'internal scratch']
  %s0 = inlined_call_operand.hbm [shape: f32[16,32], index: 0, kind: input, shape index: {}]
  %s1 = inlined_call_operand.hbm [shape: f32[16,32], index: 1, kind: input, shape index: {}]
  %s2 = inlined_call_operand.vmem [shape: f32[2,1,1], index: 2, kind: output, shape index: {}]
  %s3 = sld [smem:[#allocation0]]
  $region49: #{tpu_custom_call.1} parent=0
    _
  %s5 = ssub.s32 1, %s3
  %s6 = scalar_select 0, %s5, %s3
  $region1: #{tpu_custom_call.1} parent=0
    #allocation2 [shape = 'u8[8192]{0}', space=vmem, size = 0x2000, scoped, tag = 'input window, operand 0']
    #allocation3 [shape = 's32[2]{0}', space=sflag, size = 0x8, scoped, tag = 'scoped memory for tpu_custom_call.1']
    #allocation4 [shape = 'u8[8192]{0}', space=vmem, size = 0x2000, scoped, tag = 'input window, operand 1']
    #allocation5 [shape = 's32[2]{0}', space=sflag, size = 0x8, scoped, tag = 'scoped memory for tpu_custom_call.1']
    %7 = vsyncpa [#allocation3], 0
    %s8 = scalar_lea.sflag [#allocation3], 1
    %9 = vsyncpa %s8, 0
    %10 = vsyncpa [#allocation5], 0
    %s11 = scalar_lea.sflag [#allocation5], 1
    %12 = vsyncpa %s11, 0
    loop: start=0, step=1, limit=4
    $region2: #{tpu_custom_call.1} parent=1 // loop_pre_header
      _
    $region3: #{tpu_custom_call.1} parent=1 // loop_header
      %s14 = sphi 0, %s18
      %p15 = scmp.ge.s32.totalorder %s14, 4
      %s24 = sphi 0, %s26
      %s27 = sphi 0, %s24
      %s28 = sphi 0, %s27
      %s44 = sphi 0, %s28
      %s50 = sphi 0, %s52
      %s53 = sphi 0, %s50
      %s54 = sphi 0, %s53
      %s70 = sphi 0, %s54
      %s76 = sphi 0, %s78
      %s79 = sphi 0, %s76
      %s80 = sphi 0, %s79
      %s96 = sphi 0, %s80
    $region4: #{tpu_custom_call.1} parent=1 // loop_header_branch
      %17 = sbr.rel (%p15) target = $region8
    $region5: #{tpu_custom_call.1} parent=1 // loop_body
      %s19 = ssub.s32 %s14, 1
      %s20 = ssub.s32 %s14, 2
      %s21 = sadd.s32 %s14, 1
      %s22 = ssub.s32 %s14, %s21
      %p23 = scmp.eq.s32.totalorder %s22, 0
      %s25 = sadd.s32 %s24, 1
      %s26 = scalar_select %p23, %s24, %s25
      %p29 = pneg %p23
      %p30 = scmp.eq.s32.totalorder %s14, 1
      %p31 = por %p29, %p30
      %p32 = scmp.ne.s32.totalorder %s24, %s27
      %p33 = scmp.eq.s32.totalorder %s14, 0
      %p34 = por %p32, %p33
      %p35 = scmp.ne.s32.totalorder %s24, %s27
      %p36 = scmp.eq.s32.totalorder %s19, 1
      %p37 = por %p35, %p36
      %p38 = scmp.ne.s32.totalorder %s27, %s28
      %p39 = scmp.eq.s32.totalorder %s19, 0
      %p40 = por %p38, %p39
      %p41 = scmp.ne.s32.totalorder %s27, %s28
      %p42 = scmp.eq.s32.totalorder %s20, 1
      %p43 = por %p41, %p42
      %p45 = scmp.ne.s32.totalorder %s28, %s44
      %p46 = scmp.eq.s32.totalorder %s20, 0
      %p47 = por %p45, %p46
      %s48 = ssub.s32 %s14, %s21
      %p49 = scmp.eq.s32.totalorder %s48, 0
      %s51 = sadd.s32 %s50, 1
      %s52 = scalar_select %p49, %s50, %s51
      %p55 = pneg %p49
      %p56 = scmp.eq.s32.totalorder %s14, 1
      %p57 = por %p55, %p56
      %p58 = scmp.ne.s32.totalorder %s50, %s53
      %p59 = scmp.eq.s32.totalorder %s14, 0
      %p60 = por %p58, %p59
      %p61 = scmp.ne.s32.totalorder %s50, %s53
      %p62 = scmp.eq.s32.totalorder %s19, 1
      %p63 = por %p61, %p62
      %p64 = scmp.ne.s32.totalorder %s53, %s54
      %p65 = scmp.eq.s32.totalorder %s19, 0
      %p66 = por %p64, %p65
      %p67 = scmp.ne.s32.totalorder %s53, %s54
      %p68 = scmp.eq.s32.totalorder %s20, 1
      %p69 = por %p67, %p68
      %p71 = scmp.ne.s32.totalorder %s54, %s70
      %p72 = scmp.eq.s32.totalorder %s20, 0
      %p73 = por %p71, %p72
      %s74 = ssub.s32 %s14, %s21
      %p75 = scmp.eq.s32.totalorder %s74, 0
      %s77 = sadd.s32 %s76, 1
      %s78 = scalar_select %p75, %s76, %s77
      %p81 = pneg %p75
      %p82 = scmp.eq.s32.totalorder %s14, 1
      %p83 = por %p81, %p82
      %p84 = scmp.ne.s32.totalorder %s76, %s79
      %p85 = scmp.eq.s32.totalorder %s14, 0
      %p86 = por %p84, %p85
      %p87 = scmp.ne.s32.totalorder %s76, %s79
      %p88 = scmp.eq.s32.totalorder %s19, 1
      %p89 = por %p87, %p88
      %p90 = scmp.ne.s32.totalorder %s79, %s80
      %p91 = scmp.eq.s32.totalorder %s19, 0
      %p92 = por %p90, %p91
      %p93 = scmp.ne.s32.totalorder %s79, %s80
      %p94 = scmp.eq.s32.totalorder %s20, 1
      %p95 = por %p93, %p94
      %p97 = scmp.ne.s32.totalorder %s80, %s96
      %p98 = scmp.eq.s32.totalorder %s20, 0
      %p99 = por %p97, %p98
      %p100 = scmp.le.s32.totalorder 1, %s14
      %p101 = scmp.lt.s32.totalorder %s14, 3
      %p102 = pnand %p100, %p101
      %p103 = pneg %p102
      // Predicated region
      $region9: #{tpu_custom_call.1} parent=5 // pred_check
        _
      $region10: #{tpu_custom_call.1} parent=5 // pred_check_branch
        %105 = sbr.rel (%p102) target = $region12
      $region11: #{tpu_custom_call.1} parent=5 // pred_region
        %s106 = ssub.s32 %s14, 1
      $region12: #{tpu_custom_call.1} parent=5 // pred_fallthru
        _
      %p107 = scmp.lt.s32.totalorder %s14, 2
      // Predicated region
      $region13: #{tpu_custom_call.1} parent=5 // pred_check
        %p108 = pneg %p107
      $region14: #{tpu_custom_call.1} parent=5 // pred_check_branch
        %110 = sbr.rel (%p108) target = $region16
      $region15: #{tpu_custom_call.1} parent=5 // pred_region
        // Predicated region
        $region17: #{tpu_custom_call.1} parent=15 // pred_check
          %p111 = pneg %p34
        $region18: #{tpu_custom_call.1} parent=15 // pred_check_branch
          %113 = sbr.rel (%p111) target = $region20
        $region19: #{tpu_custom_call.1} parent=15 // pred_region
          %s114 = sand.u32 %s24, 1
          %s115 = scalar_lea.sflag [#allocation3], %s114
          %s116 = sand.u32 %s24, 1
          %s117 = smul.addr %s116, 8
          %s118 = scalar_lea.vmem [#allocation2], %s117
          %s120 = ssub.s32 128, 128
          %121 = vsyncadd %s115, %s120
          %s122 = smul.addr %s14, 128
          %s123 = scalar_lea.hbm %s0, %s122
          %s125 = sshll.u32 %s118, 4
          %s126 = int_to_ptr.vmem [resolvable:$true] %s125
          %128 = dma.hbm_to_vmem [thread:$0]  %s123, 128, %s126, %s115
        $region20: #{tpu_custom_call.1} parent=15 // pred_fallthru
          _
        // Predicated region
        $region21: #{tpu_custom_call.1} parent=15 // pred_check
          %p129 = pneg %p60
        $region22: #{tpu_custom_call.1} parent=15 // pred_check_branch
          %131 = sbr.rel (%p129) target = $region24
        $region23: #{tpu_custom_call.1} parent=15 // pred_region
          %s132 = sand.u32 %s50, 1
          %s133 = scalar_lea.sflag [#allocation5], %s132
          %s134 = sand.u32 %s50, 1
          %s135 = smul.addr %s134, 8
          %s136 = scalar_lea.vmem [#allocation4], %s135
          %s138 = ssub.s32 128, 128
          %139 = vsyncadd %s133, %s138
          %s140 = smul.addr %s14, 128
          %s141 = scalar_lea.hbm %s1, %s140
          %s143 = sshll.u32 %s136, 4
          %s144 = int_to_ptr.vmem [resolvable:$true] %s143
          %146 = dma.hbm_to_vmem [thread:$0]  %s141, 128, %s144, %s133
        $region24: #{tpu_custom_call.1} parent=15 // pred_fallthru
          _
      $region16: #{tpu_custom_call.1} parent=5 // pred_fallthru
        _
      %p147 = scmp.le.s32.totalorder 1, %s14
      %p148 = scmp.lt.s32.totalorder %s14, 3
      %p149 = pnand %p147, %p148
      %p150 = pneg %p149
      // Predicated region
      $region25: #{tpu_custom_call.1} parent=5 // pred_check
        _
      $region26: #{tpu_custom_call.1} parent=5 // pred_check_branch
        %152 = sbr.rel (%p149) target = $region28
      $region27: #{tpu_custom_call.1} parent=5 // pred_region
        %s153 = ssub.s32 %s14, 1
        %s154 = sand.u32 %s27, 1
        %s155 = scalar_lea.sflag [#allocation3], %s154
        %s156 = sand.u32 %s27, 1
        %s157 = smul.addr %s156, 8
        %s158 = scalar_lea.vmem [#allocation2], %s157
        // Predicated region
        $region29: #{tpu_custom_call.1} parent=27 // pred_check
          %p159 = pneg %p40
        $region30: #{tpu_custom_call.1} parent=27 // pred_check_branch
          %161 = sbr.rel (%p159) target = $region32
        $region31: #{tpu_custom_call.1} parent=27 // pred_region
          %162 = dma.done %s155, 128
        $region32: #{tpu_custom_call.1} parent=27 // pred_fallthru
          _
        %s163 = sand.u32 %s53, 1
        %s164 = scalar_lea.sflag [#allocation5], %s163
        %s165 = sand.u32 %s53, 1
        %s166 = smul.addr %s165, 8
        %s167 = scalar_lea.vmem [#allocation4], %s166
        // Predicated region
        $region33: #{tpu_custom_call.1} parent=27 // pred_check
          %p168 = pneg %p66
        $region34: #{tpu_custom_call.1} parent=27 // pred_check_branch
          %170 = sbr.rel (%p168) target = $region36
        $region35: #{tpu_custom_call.1} parent=27 // pred_region
          %171 = dma.done %s164, 128
        $region36: #{tpu_custom_call.1} parent=27 // pred_fallthru
          _
        %s172 = sand.u32 %s27, 1
        %s173 = scalar_lea.sflag [#allocation3], %s172
        %s174 = sand.u32 %s27, 1
        %s175 = smul.addr %s174, 8
        %s176 = scalar_lea.vmem [#allocation2], %s175
        %p177 = pneg %p40
        %p178 = pneg %p37
        %s179 = sand.u32 %s53, 1
        %s180 = scalar_lea.sflag [#allocation5], %s179
        %s181 = sand.u32 %s53, 1
        %s182 = smul.addr %s181, 8
        %s183 = scalar_lea.vmem [#allocation4], %s182
        %p184 = pneg %p66
        %p185 = pneg %p63
        %p186 = pneg %p92
        %p187 = pneg %p89
        %p188 = scmp.lt.s32.totalorder %s19, 1
        %s189 = scalar_select %p188, %s19, 1
        %s190 = scalar_lea.vmem %s2, %s189
        %p191 = scmp.lt.s32.totalorder %s19, 1
        %s192 = scalar_select %p191, %s19, 1
        %s193 = scalar_lea.vmem %s2, %s192
        %v194 = vld [vmem:[%s158] ss:$4 sm:$0x3]
        %s195 = scalar_lea.vmem %s158, 1 [#allocation2]
        %v196 = vld [vmem:[%s195] ss:$4 sm:$0x3]
        %s197 = scalar_lea.vmem %s158, 2 [#allocation2]
        %v198 = vld [vmem:[%s197] ss:$4 sm:$0x3]
        %s199 = scalar_lea.vmem %s158, 3 [#allocation2]
        %v200 = vld [vmem:[%s199] ss:$4 sm:$0x3]
        %v201 = vld [vmem:[%s167] ss:$4 sm:$0x3]
        %s202 = scalar_lea.vmem %s167, 1 [#allocation4]
        %v203 = vld [vmem:[%s202] ss:$4 sm:$0x3]
        %s204 = scalar_lea.vmem %s167, 2 [#allocation4]
        %v205 = vld [vmem:[%s204] ss:$4 sm:$0x3]
        %s206 = scalar_lea.vmem %s167, 3 [#allocation4]
        %v207 = vld [vmem:[%s206] ss:$4 sm:$0x3]
        %v208 = vadd.f32 %v194, %v196
        %v209 = vadd.f32 %v201, %v203
        %v210 = vadd.f32 %v208, %v198
        %v211 = vadd.f32 %v209, %v205
        %v212 = vadd.f32 %v210, %v200
        %v213 = vadd.f32 %v211, %v207
        %v214 = vmul.f32 %v212, 0.25
        %v215 = vmul.f32 %v213, 0.25
        %v216 = vmul.f32 %v194, 4.0
        %v217 = vsub.f32 %v216, %v212
        %v218 = vmul.f32 %v217, %v217
        %vm219 = vcmask 254976
        %v220 = vsel %vm219, %v218, 0.0
        %221 = vadd.xlane.f32.xlu0 %v220
        %v222 = vpop.xlane.xlu0 %221
        %v223 = vmul.f32 %v222, 0.11111111
        %v224 = vmax.f32 %v223, 1e-12
        %v225 = vrsqrt.pop %v224
        %v226 = vmul.f32 %v224, %v225
        %vm227 = vcmp.eq.f32.partialorder %v224, inf
        %v228 = vsel %vm227, %v224, %v226
        %vm229 = vcmp.eq.f32.partialorder %v224, 0.0
        %v230 = vand.u32 %v224, 2147483648
        %v231 = vsel %vm229, %v230, %v228
        %v232 = vmul.f32 %v201, 3.0
        %v233 = vadd.f32 %v232, %v194
        %v234 = vsub.f32 %v233, %v212
        %v235 = vmul.f32 %v234, %v234
        %v236 = vsel %vm219, %v235, 0.0
        %237 = vadd.xlane.f32.xlu0 %v236
        %v238 = vpop.xlane.xlu0 %237
        %v239 = vmul.f32 %v238, 0.11111111
        %v240 = vmax.f32 %v239, 1e-12
        %v241 = vrsqrt.pop %v240
        %v242 = vmul.f32 %v240, %v241
        %vm243 = vcmp.eq.f32.partialorder %v240, inf
        %v244 = vsel %vm243, %v240, %v242
        %vm245 = vcmp.eq.f32.partialorder %v240, 0.0
        %v246 = vand.u32 %v240, 2147483648
        %v247 = vsel %vm245, %v246, %v244
        %v248 = vsub.f32 %v194, %v215
        %v249 = vmul.f32 %v248, %v248
        %v250 = vsel %vm219, %v249, 0.0
        %251 = vadd.xlane.f32.xlu0 %v250
        %v252 = vpop.xlane.xlu0 %251
        %v253 = vmax.f32 %v252, 1e-12
        %v254 = vrsqrt.pop %v253
        %v255 = vmul.f32 %v253, %v254
        %vm256 = vcmp.eq.f32.partialorder %v253, inf
        %v257 = vsel %vm256, %v253, %v255
        %vm258 = vcmp.eq.f32.partialorder %v253, 0.0
        %v259 = vand.u32 %v253, 2147483648
        %v260 = vsel %vm258, %v259, %v257
        %v261 = vsub.f32 %v201, %v214
        %v262 = vmul.f32 %v261, %v261
        %v263 = vsel %vm219, %v262, 0.0
        %264 = vadd.xlane.f32.xlu0 %v263
        %v265 = vpop.xlane.xlu0 %264
        %v266 = vmax.f32 %v265, 1e-12
        %v267 = vrsqrt.pop %v266
        %v268 = vmul.f32 %v266, %v267
        %vm269 = vcmp.eq.f32.partialorder %v266, inf
        %v270 = vsel %vm269, %v266, %v268
        %vm271 = vcmp.eq.f32.partialorder %v266, 0.0
        %v272 = vand.u32 %v266, 2147483648
        %v273 = vsel %vm271, %v272, %v270
        %v274 = vsub.f32 %v260, %v231
        %v275 = vmul.f32 %v274, %v274
        %v276 = vsub.f32 %v273, %v247
        %v277 = vmul.f32 %v276, %v276
        %v278 = vadd.f32 %v275, %v277
        %vm279 = vcmask 1041408
        %v280 = vsel %vm279, %v278, 0.0
        %v281 = vrot.slane %v280, 4
        %v282 = vadd.f32 %v280, %v281
        %v283 = vrot.slane %v282, 2
        %v284 = vadd.f32 %v282, %v283
        %v285 = vrot.slane %v284, 1
        %v286 = vadd.f32 %v284, %v285
        %v287 = vadd.f32 %v286, 0.0
        %v288 = vmul.f32 %v196, 4.0
        %v289 = vsub.f32 %v288, %v212
        %v290 = vmul.f32 %v289, %v289
        %v291 = vsel %vm219, %v290, 0.0
        %292 = vadd.xlane.f32.xlu0 %v291
        %v293 = vpop.xlane.xlu0 %292
        %v294 = vmul.f32 %v293, 0.11111111
        %v295 = vmax.f32 %v294, 1e-12
        %v296 = vrsqrt.pop %v295
        %v297 = vmul.f32 %v295, %v296
        %vm298 = vcmp.eq.f32.partialorder %v295, inf
        %v299 = vsel %vm298, %v295, %v297
        %vm300 = vcmp.eq.f32.partialorder %v295, 0.0
        %v301 = vand.u32 %v295, 2147483648
        %v302 = vsel %vm300, %v301, %v299
        %v303 = vmul.f32 %v203, 3.0
        %v304 = vadd.f32 %v303, %v196
        %v305 = vsub.f32 %v304, %v212
        %v306 = vmul.f32 %v305, %v305
        %v307 = vsel %vm219, %v306, 0.0
        %308 = vadd.xlane.f32.xlu0 %v307
        %v309 = vpop.xlane.xlu0 %308
        %v310 = vmul.f32 %v309, 0.11111111
        %v311 = vmax.f32 %v310, 1e-12
        %v312 = vrsqrt.pop %v311
        %v313 = vmul.f32 %v311, %v312
        %vm314 = vcmp.eq.f32.partialorder %v311, inf
        %v315 = vsel %vm314, %v311, %v313
        %vm316 = vcmp.eq.f32.partialorder %v311, 0.0
        %v317 = vand.u32 %v311, 2147483648
        %v318 = vsel %vm316, %v317, %v315
        %v319 = vsub.f32 %v196, %v215
        %v320 = vmul.f32 %v319, %v319
        %v321 = vsel %vm219, %v320, 0.0
        %322 = vadd.xlane.f32.xlu0 %v321
        %v323 = vpop.xlane.xlu0 %322
        %v324 = vmax.f32 %v323, 1e-12
        %v325 = vrsqrt.pop %v324
        %v326 = vmul.f32 %v324, %v325
        %vm327 = vcmp.eq.f32.partialorder %v324, inf
        %v328 = vsel %vm327, %v324, %v326
        %vm329 = vcmp.eq.f32.partialorder %v324, 0.0
        %v330 = vand.u32 %v324, 2147483648
        %v331 = vsel %vm329, %v330, %v328
        %v332 = vsub.f32 %v203, %v214
        %v333 = vmul.f32 %v332, %v332
        %v334 = vsel %vm219, %v333, 0.0
        %335 = vadd.xlane.f32.xlu0 %v334
        %v336 = vpop.xlane.xlu0 %335
        %v337 = vmax.f32 %v336, 1e-12
        %v338 = vrsqrt.pop %v337
        %v339 = vmul.f32 %v337, %v338
        %vm340 = vcmp.eq.f32.partialorder %v337, inf
        %v341 = vsel %vm340, %v337, %v339
        %vm342 = vcmp.eq.f32.partialorder %v337, 0.0
        %v343 = vand.u32 %v337, 2147483648
        %v344 = vsel %vm342, %v343, %v341
        %v345 = vsub.f32 %v331, %v302
        %v346 = vmul.f32 %v345, %v345
        %v347 = vsub.f32 %v344, %v318
        %v348 = vmul.f32 %v347, %v347
        %v349 = vadd.f32 %v346, %v348
        %v350 = vsel %vm279, %v349, 0.0
        %v351 = vrot.slane %v350, 4
        %v352 = vadd.f32 %v350, %v351
        %v353 = vrot.slane %v352, 2
        %v354 = vadd.f32 %v352, %v353
        %v355 = vrot.slane %v354, 1
        %v356 = vadd.f32 %v354, %v355
        %v357 = vadd.f32 %v287, %v356
        %v358 = vmul.f32 %v198, 4.0
        %v359 = vsub.f32 %v358, %v212
        %v360 = vmul.f32 %v359, %v359
        %v361 = vsel %vm219, %v360, 0.0
        %362 = vadd.xlane.f32.xlu0 %v361
        %v363 = vpop.xlane.xlu0 %362
        %v364 = vmul.f32 %v363, 0.11111111
        %v365 = vmax.f32 %v364, 1e-12
        %v366 = vrsqrt.pop %v365
        %v367 = vmul.f32 %v365, %v366
        %vm368 = vcmp.eq.f32.partialorder %v365, inf
        %v369 = vsel %vm368, %v365, %v367
        %vm370 = vcmp.eq.f32.partialorder %v365, 0.0
        %v371 = vand.u32 %v365, 2147483648
        %v372 = vsel %vm370, %v371, %v369
        %v373 = vmul.f32 %v205, 3.0
        %v374 = vadd.f32 %v373, %v198
        %v375 = vsub.f32 %v374, %v212
        %v376 = vmul.f32 %v375, %v375
        %v377 = vsel %vm219, %v376, 0.0
        %378 = vadd.xlane.f32.xlu0 %v377
        %v379 = vpop.xlane.xlu0 %378
        %v380 = vmul.f32 %v379, 0.11111111
        %v381 = vmax.f32 %v380, 1e-12
        %v382 = vrsqrt.pop %v381
        %v383 = vmul.f32 %v381, %v382
        %vm384 = vcmp.eq.f32.partialorder %v381, inf
        %v385 = vsel %vm384, %v381, %v383
        %vm386 = vcmp.eq.f32.partialorder %v381, 0.0
        %v387 = vand.u32 %v381, 2147483648
        %v388 = vsel %vm386, %v387, %v385
        %v389 = vsub.f32 %v198, %v215
        %v390 = vmul.f32 %v389, %v389
        %v391 = vsel %vm219, %v390, 0.0
        %392 = vadd.xlane.f32.xlu0 %v391
        %v393 = vpop.xlane.xlu0 %392
        %v394 = vmax.f32 %v393, 1e-12
        %v395 = vrsqrt.pop %v394
        %v396 = vmul.f32 %v394, %v395
        %vm397 = vcmp.eq.f32.partialorder %v394, inf
        %v398 = vsel %vm397, %v394, %v396
        %vm399 = vcmp.eq.f32.partialorder %v394, 0.0
        %v400 = vand.u32 %v394, 2147483648
        %v401 = vsel %vm399, %v400, %v398
        %v402 = vsub.f32 %v205, %v214
        %v403 = vmul.f32 %v402, %v402
        %v404 = vsel %vm219, %v403, 0.0
        %405 = vadd.xlane.f32.xlu0 %v404
        %v406 = vpop.xlane.xlu0 %405
        %v407 = vmax.f32 %v406, 1e-12
        %v408 = vrsqrt.pop %v407
        %v409 = vmul.f32 %v407, %v408
        %vm410 = vcmp.eq.f32.partialorder %v407, inf
        %v411 = vsel %vm410, %v407, %v409
        %vm412 = vcmp.eq.f32.partialorder %v407, 0.0
        %v413 = vand.u32 %v407, 2147483648
        %v414 = vsel %vm412, %v413, %v411
        %v415 = vsub.f32 %v401, %v372
        %v416 = vmul.f32 %v415, %v415
        %v417 = vsub.f32 %v414, %v388
        %v418 = vmul.f32 %v417, %v417
        %v419 = vadd.f32 %v416, %v418
        %v420 = vsel %vm279, %v419, 0.0
        %v421 = vrot.slane %v420, 4
        %v422 = vadd.f32 %v420, %v421
        %v423 = vrot.slane %v422, 2
        %v424 = vadd.f32 %v422, %v423
        %v425 = vrot.slane %v424, 1
        %v426 = vadd.f32 %v424, %v425
        %v427 = vadd.f32 %v357, %v426
        %v428 = vmul.f32 %v200, 4.0
        %v429 = vsub.f32 %v428, %v212
        %v430 = vmul.f32 %v429, %v429
        %v431 = vsel %vm219, %v430, 0.0
        %432 = vadd.xlane.f32.xlu0 %v431
        %v433 = vpop.xlane.xlu0 %432
        %v434 = vmul.f32 %v433, 0.11111111
        %v435 = vmax.f32 %v434, 1e-12
        %v436 = vrsqrt.pop %v435
        %v437 = vmul.f32 %v435, %v436
        %vm438 = vcmp.eq.f32.partialorder %v435, inf
        %v439 = vsel %vm438, %v435, %v437
        %vm440 = vcmp.eq.f32.partialorder %v435, 0.0
        %v441 = vand.u32 %v435, 2147483648
        %v442 = vsel %vm440, %v441, %v439
        %v443 = vmul.f32 %v207, 3.0
        %v444 = vadd.f32 %v443, %v200
        %v445 = vsub.f32 %v444, %v212
        %v446 = vmul.f32 %v445, %v445
        %v447 = vsel %vm219, %v446, 0.0
        %448 = vadd.xlane.f32.xlu0 %v447
        %v449 = vpop.xlane.xlu0 %448
        %v450 = vmul.f32 %v449, 0.11111111
        %v451 = vmax.f32 %v450, 1e-12
        %v452 = vrsqrt.pop %v451
        %v453 = vmul.f32 %v451, %v452
        %vm454 = vcmp.eq.f32.partialorder %v451, inf
        %v455 = vsel %vm454, %v451, %v453
        %vm456 = vcmp.eq.f32.partialorder %v451, 0.0
        %v457 = vand.u32 %v451, 2147483648
        %v458 = vsel %vm456, %v457, %v455
        %v459 = vsub.f32 %v200, %v215
        %v460 = vmul.f32 %v459, %v459
        %v461 = vsel %vm219, %v460, 0.0
        %462 = vadd.xlane.f32.xlu0 %v461
        %v463 = vpop.xlane.xlu0 %462
        %v464 = vmax.f32 %v463, 1e-12
        %v465 = vrsqrt.pop %v464
        %v466 = vmul.f32 %v464, %v465
        %vm467 = vcmp.eq.f32.partialorder %v464, inf
        %v468 = vsel %vm467, %v464, %v466
        %vm469 = vcmp.eq.f32.partialorder %v464, 0.0
        %v470 = vand.u32 %v464, 2147483648
        %v471 = vsel %vm469, %v470, %v468
        %v472 = vsub.f32 %v207, %v214
        %v473 = vmul.f32 %v472, %v472
        %v474 = vsel %vm219, %v473, 0.0
        %475 = vadd.xlane.f32.xlu0 %v474
        %v476 = vpop.xlane.xlu0 %475
        %v477 = vmax.f32 %v476, 1e-12
        %v478 = vrsqrt.pop %v477
        %v479 = vmul.f32 %v477, %v478
        %vm480 = vcmp.eq.f32.partialorder %v477, inf
        %v481 = vsel %vm480, %v477, %v479
        %vm482 = vcmp.eq.f32.partialorder %v477, 0.0
        %v483 = vand.u32 %v477, 2147483648
        %v484 = vsel %vm482, %v483, %v481
        %v485 = vsub.f32 %v471, %v442
        %v486 = vmul.f32 %v485, %v485
        %v487 = vsub.f32 %v484, %v458
        %v488 = vmul.f32 %v487, %v487
        %v489 = vadd.f32 %v486, %v488
        %v490 = vsel %vm279, %v489, 0.0
        %v491 = vrot.slane %v490, 4
        %v492 = vadd.f32 %v490, %v491
        %v493 = vrot.slane %v492, 2
        %v494 = vadd.f32 %v492, %v493
        %v495 = vrot.slane %v494, 1
        %v496 = vadd.f32 %v494, %v495
        %v497 = vadd.f32 %v427, %v496
        %vm498 = vcmask 0
        %499 = vst.msk [vmem:[%s193] sm:$0x1] %vm498, %v497
        %p500 = scmp.lt.s32.totalorder %s19, 1
        %s501 = scalar_select %p500, %s19, 1
        %s502 = scalar_lea.vmem %s2, %s501
        // Predicated region
        $region37: #{tpu_custom_call.1} parent=27 // pred_check
          %p503 = pneg %p89
        $region38: #{tpu_custom_call.1} parent=27 // pred_check_branch
          %505 = sbr.rel (%p503) target = $region40
        $region39: #{tpu_custom_call.1} parent=27 // pred_region
          _
        $region40: #{tpu_custom_call.1} parent=27 // pred_fallthru
          _
      $region28: #{tpu_custom_call.1} parent=5 // pred_fallthru
        _
      %p506 = scmp.le.s32.totalorder 2, %s14
      // Predicated region
      $region41: #{tpu_custom_call.1} parent=5 // pred_check
        %p507 = pneg %p506
      $region42: #{tpu_custom_call.1} parent=5 // pred_check_branch
        %509 = sbr.rel (%p507) target = $region44
      $region43: #{tpu_custom_call.1} parent=5 // pred_region
        %s510 = ssub.s32 %s14, 2
        // Predicated region
        $region45: #{tpu_custom_call.1} parent=43 // pred_check
          %p511 = pneg %p95
        $region46: #{tpu_custom_call.1} parent=43 // pred_check_branch
          %513 = sbr.rel (%p511) target = $region48
        $region47: #{tpu_custom_call.1} parent=43 // pred_region
          %p514 = scmp.lt.s32.totalorder %s20, 1
          %s515 = scalar_select %p514, %s20, 1
          %s516 = scalar_lea.vmem %s2, %s515
        $region48: #{tpu_custom_call.1} parent=43 // pred_fallthru
          _
      $region44: #{tpu_custom_call.1} parent=5 // pred_fallthru
        _
    $region6: #{tpu_custom_call.1} parent=1 // loop_footer
      %s18 = sadd.s32 1, %s14
    $region7: #{tpu_custom_call.1} parent=1 // loop_footer_branch
      %13 = sbr.rel target = $region3
    $region8: #{tpu_custom_call.1} parent=1 // loop_exit
      _
    %517 = vsyncpa [#allocation3], 1
    %s518 = scalar_lea.sflag [#allocation3], 1
    %519 = vsyncpa %s518, 1
    %520 = vsyncpa [#allocation5], 1
    %s521 = scalar_lea.sflag [#allocation5], 1
    %522 = vsyncpa %s521, 1

</llo_original>
